<compile_context>
chip_gen: v7x
topology: tpu7x:2x2x1
jax: 0.10.0
libtpu: 0.0.40
codegen_flags: <defaults>
</compile_context>

<pallas_src>
import functools

import jax
import jax.numpy as jnp
from jax.experimental import pallas as pl
from jax.experimental.pallas import tpu as pltpu

_LANE = 128


def _round_up(x, m):
    return (x + m - 1) // m * m


def _choose_tile_pixels(c, p, itemsize):
    """Spatial (lane) tile from a VMEM byte budget, multiple of 128 lanes."""
    target_logit_bytes = 2 * 1024 * 1024      # amortizes ~0.35us/grid-step overhead
    vmem_budget_bytes = 16 * 1024 * 1024      # safe on v5e/v6e/v7x with 32 MiB scoped

    tp_from_target = max(
        _LANE, (target_logit_bytes // (c * itemsize)) // _LANE * _LANE)
    # 2x pred buffers + 2x int32 target buffers + 2x f32 output buffers
    # + ~4 f32 (C, tp) elementwise temporaries, per lane of tile.
    bytes_per_lane = 2 * c * itemsize + 2 * 4 + 2 * 4 + 4 * c * 4
    tp_from_budget = max(
        _LANE, (vmem_budget_bytes // bytes_per_lane) // _LANE * _LANE)

    return min(tp_from_target, tp_from_budget, _round_up(p, _LANE))


def cross_entropy_kernel(pred_ref, tgt_ref, out_ref, *, c, tp, n_pixels, n_si):
    so = pl.program_id(1)
    si = pl.program_id(2)

    # Output block is resident across the inner-spatial ("arbitrary") axis:
    # zero it on the first inner step only.
    @pl.when(si == 0)
    def _():
        out_ref[...] = jnp.zeros_like(out_ref)

    logits = pred_ref[0]                                   # (C, TP), native dtype
    tgt = tgt_ref[0]                                       # (1, TP), int32

    # Max-subtraction in the native dtype (bf16 VPU path on v6e/v7x); one f32
    # cast of the shifted logits feeds exp, the target gather and accumulation.
    m = jnp.max(logits, axis=0, keepdims=True)             # (1, TP)
    shifted = (logits - m).astype(jnp.float32)             # (C, TP) f32, <= 0

    denom = jnp.sum(jnp.exp(shifted), axis=0, keepdims=True)            # (1, TP)

    # Target logit via where-select (no hardware gather, no float one-hot).
    c_idx = jax.lax.broadcasted_iota(jnp.int32, (c, tp), 0)
    logit_t = jnp.sum(jnp.where(c_idx == tgt, shifted, 0.0),
                      axis=0, keepdims=True)               # (1, TP)

    # -log softmax[target] = log(sum exp(shifted)) - shifted[target]
    ce_lane = jnp.log(denom) - logit_t                     # (1, TP)

    # Ragged tail: mask lanes whose flat pixel index is >= n_pixels (logits are
    # NOT padded in the wrapper; OOB block regions contain garbage).
    pix0 = (so * n_si + si) * tp
    lane_idx = jax.lax.broadcasted_iota(jnp.int32, (1, tp), 1)
    valid = (pix0 + lane_idx) < n_pixels

    out_ref[...] += jnp.where(valid, ce_lane, 0.0)[None]   # (1, 1, TP) accumulate


def cross_entropy_loss(pred, target, *, tile_pixels=None):
    """pred: (N, C, H, W) float logits (any float dtype, DMA'd natively);
    target: (N, 1, H, W) or (N, H, W) integer class labels in [0, C)."""
    N, C, H, W = pred.shape
    P = H * W

    pred2 = pred.reshape(N, C, P)                     # keep native dtype for DMA
    tgt2 = target.reshape(N, 1, P).astype(jnp.int32)

    itemsize = jnp.dtype(pred.dtype).itemsize
    if tile_pixels is None:
        tp = _choose_tile_pixels(C, P, itemsize)
    else:
        tp = min(_round_up(tile_pixels, _LANE), _round_up(P, _LANE))

    n_blocks = pl.cdiv(P, tp)
    n_so = min(2, n_blocks)         # feed both v7x TensorCores even at batch 1
    n_si = pl.cdiv(n_blocks, n_so)

    def spatial_block(so, si):
        b = so * n_si + si
        if n_so * n_si > n_blocks:
            # Slots past the last real block re-read the last block; their
            # lanes are fully masked in-kernel (pixel index >= P).
            b = jnp.minimum(b, n_blocks - 1)
        return b

    kernel = functools.partial(
        cross_entropy_kernel, c=C, tp=tp, n_pixels=P, n_si=n_si)

    out = pl.pallas_call(
        kernel,
        out_shape=jax.ShapeDtypeStruct((N, n_so, tp), jnp.float32),
        grid_spec=pltpu.PrefetchScalarGridSpec(
            num_scalar_prefetch=0,
            grid=(N, n_so, n_si),
            in_specs=[
                pl.BlockSpec((1, C, tp), lambda n, so, si: (n, 0, spatial_block(so, si))),
                pl.BlockSpec((1, 1, tp), lambda n, so, si: (n, 0, spatial_block(so, si))),
            ],
            out_specs=pl.BlockSpec((1, 1, tp), lambda n, so, si: (n, so, 0)),
        ),
        compiler_params=pltpu.CompilerParams(
            dimension_semantics=("parallel", "parallel", "arbitrary"),
            vmem_limit_bytes=32 * 1024 * 1024),
    )(pred2, tgt2)

    # Tiny final reduction + mean normalization (true N*P, not padded extent).
    return jnp.sum(out) / jnp.float32(N * P)


def cross_entropy_ref(pred, target):
    """Pure-JAX reference mirroring the PyTorch module (CrossEntropyLoss, mean)."""
    N, C, H, W = pred.shape
    tgt = target.reshape(N, H, W).astype(jnp.int32)
    logp = jax.nn.log_softmax(pred.astype(jnp.float32), axis=1)   # (N, C, H, W)
    nll = -jnp.take_along_axis(logp, tgt[:, None], axis=1)[:, 0]  # (N, H, W)
    return jnp.mean(nll)


if __name__ == "__main__":
    key = jax.random.PRNGKey(0)
    k1, k2, k3, k4 = jax.random.split(key, 4)

    # Test 1: spec shapes, f32, budget-derived tile (single spatial block).
    N, C, H, W = 2, 4, 16, 16
    pred = jax.random.normal(k1, (N, C, H, W), dtype=jnp.float32)
    target = jax.random.randint(k2, (N, 1, H, W), 0, C, dtype=jnp.int32)
    loss = jax.block_until_ready(cross_entropy_loss(pred, target))
    ref = cross_entropy_ref(pred, target)
    assert jnp.allclose(loss, ref, rtol=1e-4, atol=1e-4), (loss, ref)

    # Test 2: ragged spatial size + forced small tile -> exercises multi-block
    # tail masking, the S_outer parallel split, and the clamped extra slot.
    N2, C2, H2, W2 = 1, 5, 20, 17
    pred2 = jax.random.normal(k3, (N2, C2, H2, W2), dtype=jnp.float32)
    target2 = jax.random.randint(k4, (N2, 1, H2, W2), 0, C2, dtype=jnp.int32)
    loss2 = jax.block_until_ready(cross_entropy_loss(pred2, target2, tile_pixels=128))
    ref2 = cross_entropy_ref(pred2, target2)
    assert jnp.allclose(loss2, ref2, rtol=1e-4, atol=1e-4), (loss2, ref2)

    # Test 3: bf16 logits (native-dtype max/subtract path), looser tolerance.
    pred3 = pred2.astype(jnp.bfloat16)
    loss3 = jax.block_until_ready(cross_entropy_loss(pred3, target2, tile_pixels=128))
    ref3 = cross_entropy_ref(pred3, target2)
    assert jnp.allclose(loss3, ref3, rtol=5e-2, atol=5e-2), (loss3, ref3)

    print("KERNEL_OK")
</pallas_src>

<mosaic_0001>
module attributes {stable_mosaic.version = 11 : i64} {
  func.func @cross_entropy_kernel(%arg0: i32, %arg1: i32, %arg2: i32, %arg3: memref<1x4x256xf32, #tpu.memory_space<vmem>>, %arg4: memref<1x1x256xi32, #tpu.memory_space<vmem>>, %arg5: memref<1x1x256xf32, #tpu.memory_space<vmem>>) attributes {dimension_semantics = [#tpu.dimension_semantics<parallel>, #tpu.dimension_semantics<parallel>, #tpu.dimension_semantics<arbitrary>], iteration_bounds = array<i64: 2, 1, 1>, scalar_prefetch = 0 : i64, scratch_operands = 0 : i64, tpu.core_type = #tpu.core_type<tc>, window_params = [{transform_indices = @transform_0, window_bounds = array<i64: 1, 4, 256>}, {transform_indices = @transform_1, window_bounds = array<i64: 1, 1, 256>}, {transform_indices = @transform_2, window_bounds = array<i64: 1, 1, 256>}]} {
    %c0_i32 = arith.constant 0 : i32
    %0 = arith.cmpi eq, %arg2, %c0_i32 : i32
    %1 = arith.extui %0 : i1 to i32
    %c0_i32_0 = arith.constant 0 : i32
    %2 = arith.cmpi ne, %1, %c0_i32_0 : i32
    scf.if %2 {
      %cst_17 = arith.constant 0.000000e+00 : f32
      %37 = vector.broadcast %cst_17 : f32 to vector<1x1x256xf32>
      %c0_18 = arith.constant 0 : index
      %c0_19 = arith.constant 0 : index
      %c0_20 = arith.constant 0 : index
      %38 = vector.load %arg5[%c0_18, %c0_19, %c0_20] : memref<1x1x256xf32, #tpu.memory_space<vmem>>, vector<1x1x256xf32>
      tpu.vector_store %arg5[%c0_18, %c0_19, %c0_20], %37 {strides = array<i32>} : memref<1x1x256xf32, #tpu.memory_space<vmem>>, vector<1x1x256xf32>,
    } else {
    }
    %c0 = arith.constant 0 : index
    %c0_1 = arith.constant 0 : index
    %c0_2 = arith.constant 0 : index
    %3 = vector.load %arg3[%c0, %c0_1, %c0_2] : memref<1x4x256xf32, #tpu.memory_space<vmem>>, vector<1x4x256xf32>
    %4 = vector.shape_cast %3 : vector<1x4x256xf32> to vector<4x256xf32>
    %c0_3 = arith.constant 0 : index
    %c0_4 = arith.constant 0 : index
    %c0_5 = arith.constant 0 : index
    %5 = vector.load %arg4[%c0_3, %c0_4, %c0_5] : memref<1x1x256xi32, #tpu.memory_space<vmem>>, vector<1x1x256xi32>
    %6 = vector.shape_cast %5 : vector<1x1x256xi32> to vector<1x256xi32>
    %cst = arith.constant dense<0xFF800000> : vector<256xf32>
    %7 = vector.multi_reduction <maximumf>, %4, %cst [0] : vector<4x256xf32> to vector<256xf32>
    %8 = vector.shape_cast %7 : vector<256xf32> to vector<1x256xf32>
    %9 = vector.broadcast %8 : vector<1x256xf32> to vector<4x256xf32>
    %10 = arith.subf %4, %9 : vector<4x256xf32>
    %11 = math.exp %10 : vector<4x256xf32>
    %cst_6 = arith.constant dense<0.000000e+00> : vector<256xf32>
    %12 = vector.multi_reduction <add>, %11, %cst_6 [0] : vector<4x256xf32> to vector<256xf32>
    %13 = vector.shape_cast %12 : vector<256xf32> to vector<1x256xf32>
    %14 = tpu.iota {dimensions = array<i32: 0>} : vector<4x256xi32>
    %15 = vector.broadcast %6 : vector<1x256xi32> to vector<4x256xi32>
    %16 = arith.cmpi eq, %14, %15 : vector<4x256xi32>
    %cst_7 = arith.constant 0.000000e+00 : f32
    %17 = vector.broadcast %cst_7 : f32 to vector<4x256xf32>
    %18 = arith.select %16, %10, %17 : vector<4x256xi1>, vector<4x256xf32>
    %cst_8 = arith.constant dense<0.000000e+00> : vector<256xf32>
    %19 = vector.multi_reduction <add>, %18, %cst_8 [0] : vector<4x256xf32> to vector<256xf32>
    %20 = vector.shape_cast %19 : vector<256xf32> to vector<1x256xf32>
    %21 = math.log %13 : vector<1x256xf32>
    %22 = arith.subf %21, %20 : vector<1x256xf32>
    %c1_i32 = arith.constant 1 : i32
    %23 = arith.muli %arg1, %c1_i32 : i32
    %24 = arith.addi %23, %arg2 : i32
    %c256_i32 = arith.constant 256 : i32
    %25 = arith.muli %24, %c256_i32 : i32
    %26 = tpu.iota {dimensions = array<i32: 1>} : vector<1x256xi32>
    %27 = vector.broadcast %25 : i32 to vector<1x256xi32>
    %28 = arith.addi %27, %26 : vector<1x256xi32>
    %c256_i32_9 = arith.constant 256 : i32
    %29 = vector.broadcast %c256_i32_9 : i32 to vector<1x256xi32>
    %30 = arith.cmpi slt, %28, %29 : vector<1x256xi32>
    %c0_10 = arith.constant 0 : index
    %c0_11 = arith.constant 0 : index
    %c0_12 = arith.constant 0 : index
    %31 = vector.load %arg5[%c0_10, %c0_11, %c0_12] : memref<1x1x256xf32, #tpu.memory_space<vmem>>, vector<1x1x256xf32>
    %cst_13 = arith.constant 0.000000e+00 : f32
    %32 = vector.broadcast %cst_13 : f32 to vector<1x256xf32>
    %33 = arith.select %30, %22, %32 : vector<1x256xi1>, vector<1x256xf32>
    %34 = vector.shape_cast %33 : vector<1x256xf32> to vector<1x1x256xf32>
    %35 = arith.addf %31, %34 : vector<1x1x256xf32>
    %c0_14 = arith.constant 0 : index
    %c0_15 = arith.constant 0 : index
    %c0_16 = arith.constant 0 : index
    %36 = vector.load %arg5[%c0_14, %c0_15, %c0_16] : memref<1x1x256xf32, #tpu.memory_space<vmem>>, vector<1x1x256xf32>
    tpu.vector_store %arg5[%c0_14, %c0_15, %c0_16], %35 {strides = array<i32>} : memref<1x1x256xf32, #tpu.memory_space<vmem>>, vector<1x1x256xf32>,
    return
  }
  func.func @transform_0(%arg0: i32, %arg1: i32, %arg2: i32) -> (i32, i32, i32) {
    %c1_i32 = arith.constant 1 : i32
    %0 = arith.muli %arg1, %c1_i32 : i32
    %1 = arith.addi %0, %arg2 : i32
    %c0_i32 = arith.constant 0 : i32
    %c0_i32_0 = arith.constant 0 : i32
    return %arg0, %c0_i32, %1 : i32, i32, i32
  }
  func.func @transform_1(%arg0: i32, %arg1: i32, %arg2: i32) -> (i32, i32, i32) {
    %c1_i32 = arith.constant 1 : i32
    %0 = arith.muli %arg1, %c1_i32 : i32
    %1 = arith.addi %0, %arg2 : i32
    %c0_i32 = arith.constant 0 : i32
    %c0_i32_0 = arith.constant 0 : i32
    return %arg0, %c0_i32, %1 : i32, i32, i32
  }
  func.func @transform_2(%arg0: i32, %arg1: i32, %arg2: i32) -> (i32, i32, i32) {
    %c0_i32 = arith.constant 0 : i32
    %c0_i32_0 = arith.constant 0 : i32
    return %arg0, %arg1, %c0_i32 : i32, i32, i32
  }
}

</mosaic_0001>

<llo_original>
// kernel: tpu_custom_call.1
$region0: #{tpu_custom_call.1}
  #allocation0 [shape = 'u32[]', space=smem, size = 0x4, offset = 0x4, fixed_abs, tag = 'smem constant byte address 0x4 - core index']
  #allocation1 [shape = 'u32[144,128]{1,0:T(1,128)}', space=vmem, size = 0x12000, scoped, tag = 'internal scratch']
  %s0 = inlined_call_operand.hbm [shape: f32[2,4,256], index: 0, kind: input, shape index: {}]
  %s1 = inlined_call_operand.hbm [shape: s32[2,1,256], index: 1, kind: input, shape index: {}]
  %s2 = inlined_call_operand.hbm [shape: f32[2,1,256], index: 2, kind: output, shape index: {}]
  %s3 = sld [smem:[#allocation0]]
  $region53: #{tpu_custom_call.1} parent=0
    _
  %s5 = ssub.s32 1, %s3
  %s6 = scalar_select 0, %s5, %s3
  $region1: #{tpu_custom_call.1} parent=0
    #allocation2 [shape = 'u8[8192]{0}', space=vmem, size = 0x2000, scoped, tag = 'input window, operand 0']
    #allocation3 [shape = 's32[2]{0}', space=sflag, size = 0x8, scoped, tag = 'scoped memory for tpu_custom_call.1']
    #allocation4 [shape = 's32[2]{0}', space=sflag, size = 0x8, scoped, tag = 'scoped memory for tpu_custom_call.1']
    #allocation5 [shape = 'u8[2048]{0}', space=vmem, size = 0x800, scoped, tag = 'input window, operand 1']
    #allocation6 [shape = 's32[2]{0}', space=sflag, size = 0x8, scoped, tag = 'scoped memory for tpu_custom_call.1']
    #allocation7 [shape = 'u8[2048]{0}', space=vmem, size = 0x800, scoped, tag = 'output window, operand 0']
    %7 = vsyncpa [#allocation3], 0
    %s8 = scalar_lea.sflag [#allocation3], 1
    %9 = vsyncpa %s8, 0
    %10 = vsyncpa [#allocation6], 0
    %s11 = scalar_lea.sflag [#allocation6], 1
    %12 = vsyncpa %s11, 0
    %13 = vsyncpa [#allocation4], 0
    %s14 = scalar_lea.sflag [#allocation4], 1
    %15 = vsyncpa %s14, 0
    loop: start=0, step=1, limit=4
    $region2: #{tpu_custom_call.1} parent=1 // loop_pre_header
      _
    $region3: #{tpu_custom_call.1} parent=1 // loop_header
      %s17 = sphi 0, %s21
      %p18 = scmp.ge.s32.totalorder %s17, 4
      %s24 = sphi 0, %s43
      %s25 = sphi 0, %s39
      %s26 = sphi 0, %s35
      %s27 = sphi 0, %s24
      %s28 = sphi 0, %s25
      %s29 = sphi 0, %s26
      %s30 = sphi 0, %s27
      %s31 = sphi 0, %s28
      %s32 = sphi 0, %s29
      %s50 = sphi 0, %s52
      %s53 = sphi 0, %s50
      %s54 = sphi 0, %s53
      %s70 = sphi 0, %s54
      %s80 = sphi 0, %s82
      %s83 = sphi 0, %s80
      %s84 = sphi 0, %s83
      %s100 = sphi 0, %s84
      %s108 = sphi 0, %s110
      %s111 = sphi 0, %s108
      %s112 = sphi 0, %s111
      %s128 = sphi 0, %s112
    $region4: #{tpu_custom_call.1} parent=1 // loop_header_branch
      %20 = sbr.rel (%p18) target = $region8
    $region5: #{tpu_custom_call.1} parent=1 // loop_body
      %s22 = ssub.s32 %s17, 1
      %s23 = ssub.s32 %s17, 2
      %s33 = sadd.s32 1, %s26
      %p34 = scmp.ge.s32.totalorder %s33, 1
      %s35 = scalar_select %p34, 0, %s33
      %s36 = sadd.s32 1, %s25
      %s37 = scalar_select %p34, %s36, %s25
      %p38 = scmp.ge.s32.totalorder %s37, 1
      %s39 = scalar_select %p38, 0, %s37
      %s40 = sadd.s32 1, %s24
      %s41 = scalar_select %p38, %s40, %s24
      %p42 = scmp.ge.s32.totalorder %s41, 2
      %s43 = scalar_select %p42, 0, %s41
      %s44 = sadd.s32 %s25, %s26
      %s45 = sadd.s32 %s39, %s35
      %s46 = ssub.s32 %s24, %s43
      %s47 = ssub.s32 %s44, %s45
      %s48 = sor.u32 %s46, %s47
      %p49 = scmp.eq.s32.totalorder %s48, 0
      %s51 = sadd.s32 %s50, 1
      %s52 = scalar_select %p49, %s50, %s51
      %p55 = pneg %p49
      %p56 = scmp.eq.s32.totalorder %s17, 1
      %p57 = por %p55, %p56
      %p58 = scmp.ne.s32.totalorder %s50, %s53
      %p59 = scmp.eq.s32.totalorder %s17, 0
      %p60 = por %p58, %p59
      %p61 = scmp.ne.s32.totalorder %s50, %s53
      %p62 = scmp.eq.s32.totalorder %s22, 1
      %p63 = por %p61, %p62
      %p64 = scmp.ne.s32.totalorder %s53, %s54
      %p65 = scmp.eq.s32.totalorder %s22, 0
      %p66 = por %p64, %p65
      %p67 = scmp.ne.s32.totalorder %s53, %s54
      %p68 = scmp.eq.s32.totalorder %s23, 1
      %p69 = por %p67, %p68
      %p71 = scmp.ne.s32.totalorder %s54, %s70
      %p72 = scmp.eq.s32.totalorder %s23, 0
      %p73 = por %p71, %p72
      %s74 = sadd.s32 %s25, %s26
      %s75 = sadd.s32 %s39, %s35
      %s76 = ssub.s32 %s24, %s43
      %s77 = ssub.s32 %s74, %s75
      %s78 = sor.u32 %s76, %s77
      %p79 = scmp.eq.s32.totalorder %s78, 0
      %s81 = sadd.s32 %s80, 1
      %s82 = scalar_select %p79, %s80, %s81
      %p85 = pneg %p79
      %p86 = scmp.eq.s32.totalorder %s17, 1
      %p87 = por %p85, %p86
      %p88 = scmp.ne.s32.totalorder %s80, %s83
      %p89 = scmp.eq.s32.totalorder %s17, 0
      %p90 = por %p88, %p89
      %p91 = scmp.ne.s32.totalorder %s80, %s83
      %p92 = scmp.eq.s32.totalorder %s22, 1
      %p93 = por %p91, %p92
      %p94 = scmp.ne.s32.totalorder %s83, %s84
      %p95 = scmp.eq.s32.totalorder %s22, 0
      %p96 = por %p94, %p95
      %p97 = scmp.ne.s32.totalorder %s83, %s84
      %p98 = scmp.eq.s32.totalorder %s23, 1
      %p99 = por %p97, %p98
      %p101 = scmp.ne.s32.totalorder %s84, %s100
      %p102 = scmp.eq.s32.totalorder %s23, 0
      %p103 = por %p101, %p102
      %s104 = ssub.s32 %s24, %s43
      %s105 = ssub.s32 %s25, %s39
      %s106 = sor.u32 %s104, %s105
      %p107 = scmp.eq.s32.totalorder %s106, 0
      %s109 = sadd.s32 %s108, 1
      %s110 = scalar_select %p107, %s108, %s109
      %p113 = pneg %p107
      %p114 = scmp.eq.s32.totalorder %s17, 1
      %p115 = por %p113, %p114
      %p116 = scmp.ne.s32.totalorder %s108, %s111
      %p117 = scmp.eq.s32.totalorder %s17, 0
      %p118 = por %p116, %p117
      %p119 = scmp.ne.s32.totalorder %s108, %s111
      %p120 = scmp.eq.s32.totalorder %s22, 1
      %p121 = por %p119, %p120
      %p122 = scmp.ne.s32.totalorder %s111, %s112
      %p123 = scmp.eq.s32.totalorder %s22, 0
      %p124 = por %p122, %p123
      %p125 = scmp.ne.s32.totalorder %s111, %s112
      %p126 = scmp.eq.s32.totalorder %s23, 1
      %p127 = por %p125, %p126
      %p129 = scmp.ne.s32.totalorder %s112, %s128
      %p130 = scmp.eq.s32.totalorder %s23, 0
      %p131 = por %p129, %p130
      %p132 = scmp.le.s32.totalorder 1, %s17
      %p133 = scmp.lt.s32.totalorder %s17, 3
      %p134 = pnand %p132, %p133
      %p135 = pneg %p134
      // Predicated region
      $region9: #{tpu_custom_call.1} parent=5 // pred_check
        _
      $region10: #{tpu_custom_call.1} parent=5 // pred_check_branch
        %137 = sbr.rel (%p134) target = $region12
      $region11: #{tpu_custom_call.1} parent=5 // pred_region
        %s138 = ssub.s32 %s17, 1
      $region12: #{tpu_custom_call.1} parent=5 // pred_fallthru
        _
      %p139 = scmp.lt.s32.totalorder %s17, 2
      // Predicated region
      $region13: #{tpu_custom_call.1} parent=5 // pred_check
        %p140 = pneg %p139
      $region14: #{tpu_custom_call.1} parent=5 // pred_check_branch
        %142 = sbr.rel (%p140) target = $region16
      $region15: #{tpu_custom_call.1} parent=5 // pred_region
        // Predicated region
        $region17: #{tpu_custom_call.1} parent=15 // pred_check
          %p143 = pneg %p60
        $region18: #{tpu_custom_call.1} parent=15 // pred_check_branch
          %145 = sbr.rel (%p143) target = $region20
        $region19: #{tpu_custom_call.1} parent=15 // pred_region
          %s146 = sand.u32 %s50, 1
          %s147 = scalar_lea.sflag [#allocation3], %s146
          %s148 = sand.u32 %s50, 1
          %s149 = smul.addr %s148, 8
          %s150 = scalar_lea.vmem [#allocation2], %s149
          %s151 = sadd.s32 %s25, %s26
          %s152 = smul.u32 2, %s151
          %s154 = ssub.s32 128, 128
          %155 = vsyncadd %s147, %s154
          %s156 = smul.addr %s24, 2
          %s157 = sadd.s32 %s152, %s156
          %s158 = smul.addr %s157, 64
          %s159 = scalar_lea.hbm %s0, %s158
          %s161 = sshll.u32 %s150, 4
          %s162 = int_to_ptr.vmem [resolvable:$true] %s161
          %164 = dma.hbm_to_vmem [thread:$0]  %s159, 128, %s162, %s147
        $region20: #{tpu_custom_call.1} parent=15 // pred_fallthru
          _
        // Predicated region
        $region21: #{tpu_custom_call.1} parent=15 // pred_check
          %p165 = pneg %p90
        $region22: #{tpu_custom_call.1} parent=15 // pred_check_branch
          %167 = sbr.rel (%p165) target = $region24
        $region23: #{tpu_custom_call.1} parent=15 // pred_region
          %s168 = sand.u32 %s80, 1
          %s169 = scalar_lea.sflag [#allocation6], %s168
          %s170 = sand.u32 %s80, 1
          %s171 = smul.addr %s170, 2
          %s172 = scalar_lea.vmem [#allocation5], %s171
          %s173 = sadd.s32 %s25, %s26
          %s174 = smul.u32 2, %s173
          %s176 = ssub.s32 32, 32
          %177 = vsyncadd %s169, %s176
          %s178 = smul.addr %s24, 2
          %s179 = sadd.s32 %s174, %s178
          %s180 = smul.addr %s179, 16
          %s181 = scalar_lea.hbm %s1, %s180
          %s183 = sshll.u32 %s172, 4
          %s184 = int_to_ptr.vmem [resolvable:$true] %s183
          %186 = dma.hbm_to_vmem [thread:$0]  %s181, 32, %s184, %s169
        $region24: #{tpu_custom_call.1} parent=15 // pred_fallthru
          _
      $region16: #{tpu_custom_call.1} parent=5 // pred_fallthru
        _
      %p187 = scmp.le.s32.totalorder 1, %s17
      %p188 = scmp.lt.s32.totalorder %s17, 3
      %p189 = pnand %p187, %p188
      %p190 = pneg %p189
      // Predicated region
      $region25: #{tpu_custom_call.1} parent=5 // pred_check
        _
      $region26: #{tpu_custom_call.1} parent=5 // pred_check_branch
        %192 = sbr.rel (%p189) target = $region28
      $region27: #{tpu_custom_call.1} parent=5 // pred_region
        %s193 = ssub.s32 %s17, 1
        %s194 = sand.u32 %s53, 1
        %s195 = scalar_lea.sflag [#allocation3], %s194
        %s196 = sand.u32 %s53, 1
        %s197 = smul.addr %s196, 8
        %s198 = scalar_lea.vmem [#allocation2], %s197
        // Predicated region
        $region29: #{tpu_custom_call.1} parent=27 // pred_check
          %p199 = pneg %p66
        $region30: #{tpu_custom_call.1} parent=27 // pred_check_branch
          %201 = sbr.rel (%p199) target = $region32
        $region31: #{tpu_custom_call.1} parent=27 // pred_region
          %202 = dma.done %s195, 128
        $region32: #{tpu_custom_call.1} parent=27 // pred_fallthru
          _
        %s203 = sand.u32 %s83, 1
        %s204 = scalar_lea.sflag [#allocation6], %s203
        %s205 = sand.u32 %s83, 1
        %s206 = smul.addr %s205, 2
        %s207 = scalar_lea.vmem [#allocation5], %s206
        // Predicated region
        $region33: #{tpu_custom_call.1} parent=27 // pred_check
          %p208 = pneg %p96
        $region34: #{tpu_custom_call.1} parent=27 // pred_check_branch
          %210 = sbr.rel (%p208) target = $region36
        $region35: #{tpu_custom_call.1} parent=27 // pred_region
          %211 = dma.done %s204, 32
        $region36: #{tpu_custom_call.1} parent=27 // pred_fallthru
          _
        %s212 = sand.u32 %s53, 1
        %s213 = scalar_lea.sflag [#allocation3], %s212
        %s214 = sand.u32 %s53, 1
        %s215 = smul.addr %s214, 8
        %s216 = scalar_lea.vmem [#allocation2], %s215
        %p217 = pneg %p66
        %p218 = pneg %p63
        %s219 = sand.u32 %s83, 1
        %s220 = scalar_lea.sflag [#allocation6], %s219
        %s221 = sand.u32 %s83, 1
        %s222 = smul.addr %s221, 2
        %s223 = scalar_lea.vmem [#allocation5], %s222
        %p224 = pneg %p96
        %p225 = pneg %p93
        %p226 = pneg %p124
        %p227 = pneg %p121
        %s228 = sand.u32 %s111, 1
        %s229 = scalar_lea.sflag [#allocation4], %s228
        %s230 = sand.u32 %s111, 1
        %s231 = smul.addr %s230, 2
        %s232 = scalar_lea.vmem [#allocation7], %s231
        %s233 = sadd.s32 %s28, %s29
        %s234 = smul.u32 2, %s233
        %s235 = sadd.s32 %s28, %s29
        %s236 = smul.u32 2, %s235
        %p237 = scmp.eq.s32.totalorder %s29, 0
        // Predicated region
        $region37: #{tpu_custom_call.1} parent=27 // pred_check
          %p238 = pneg %p237
        $region38: #{tpu_custom_call.1} parent=27 // pred_check_branch
          %240 = sbr.rel (%p238) target = $region40
        $region39: #{tpu_custom_call.1} parent=27 // pred_region
          %v241 = vlaneseq
          %vm242 = vcmp.ge.s32.totalorder %v241, 0
          %vm243 = vcmp.lt.s32.totalorder %v241, 256
          %vm244 = vmand %vm242, %vm243
          %245 = vst.msk [vmem:[%s232] sm:$0x3] %vm244, 0.0
        $region40: #{tpu_custom_call.1} parent=27 // pred_fallthru
          _
        %v246 = vld [vmem:[%s198] sm:$0xff]
        %v247 = vld [vmem:[%s207] sm:$0x3]
        %v249 = vcombine.high %v246, %v246
        %vm251 = vcmask 1043456
        %v252 = vsel %vm251, %v246, -inf
        %v253 = vrot.slane %v252, 4
        %v254 = vmax.f32 %v252, %v253
        %v255 = vrot.slane %v254, 2
        %v256 = vmax.f32 %v254, %v255
        %v257 = vrot.slane %v256, 1
        %v258 = vmax.f32 %v256, %v257
        %v259 = vsel %vm251, %v249, -inf
        %v260 = vrot.slane %v259, 4
        %v261 = vmax.f32 %v259, %v260
        %v262 = vrot.slane %v261, 2
        %v263 = vmax.f32 %v261, %v262
        %v264 = vrot.slane %v263, 1
        %v265 = vmax.f32 %v263, %v264
        %v268 = vcombine.low %v258, %v265
        %v270 = vsub.f32 %v246, %v268
        %v271 = vmul.f32 %v270, 1.442695
        %v272 = vpow.pop %v271
        %v274 = vcombine.high %v272, %v272
        %v276 = vsel %vm251, %v272, 0.0
        %v277 = vrot.slane %v276, 4
        %v278 = vadd.f32 %v276, %v277
        %v279 = vrot.slane %v278, 2
        %v280 = vadd.f32 %v278, %v279
        %v281 = vrot.slane %v280, 1
        %v282 = vadd.f32 %v280, %v281
        %v283 = vsel %vm251, %v274, 0.0
        %v284 = vrot.slane %v283, 4
        %v285 = vadd.f32 %v283, %v284
        %v286 = vrot.slane %v285, 2
        %v287 = vadd.f32 %v285, %v286
        %v288 = vrot.slane %v287, 1
        %v289 = vadd.f32 %v287, %v288
        %v290 = vlaneseq
        %v291 = vshrl.u32 %v290, 7
        %v292 = vlaneseq
        %v293 = vshrl.u32 %v292, 7
        %v294 = vsub.s32 0, %v293
        %v295 = vrot.slane %v247, %v294
        %v296 = vlaneseq
        %v297 = vshrl.u32 %v296, 7
        %v298 = vsub.s32 1, %v297
        %v299 = vrot.slane %v247, %v298
        %vm300 = vcmp.eq.s32.totalorder %v291, %v295
        %vm301 = vcmp.eq.s32.totalorder %v291, %v299
        %v303 = vcombine.high %v270, %v270
        %v305 = vsel %vm300, %v270, 0.0
        %v306 = vsel %vm301, %v303, 0.0
        %v307 = vsel %vm251, %v305, 0.0
        %v308 = vrot.slane %v307, 4
        %v309 = vadd.f32 %v307, %v308
        %v310 = vrot.slane %v309, 2
        %v311 = vadd.f32 %v309, %v310
        %v312 = vrot.slane %v311, 1
        %v313 = vadd.f32 %v311, %v312
        %v314 = vsel %vm251, %v306, 0.0
        %v315 = vrot.slane %v314, 4
        %v316 = vadd.f32 %v314, %v315
        %v317 = vrot.slane %v316, 2
        %v318 = vadd.f32 %v316, %v317
        %v319 = vrot.slane %v318, 1
        %v320 = vadd.f32 %v318, %v319
        %v321 = vlog2.pop %v282
        %v322 = vmul.f32 %v321, 0.6931472
        %v323 = vlog2.pop %v289
        %v324 = vmul.f32 %v323, 0.6931472
        %v325 = vsub.f32 %v322, %v313
        %v326 = vsub.f32 %v324, %v320
        %s327 = sadd.s32 %s28, %s29
        %s328 = smul.u32 %s327, 256
        %v329 = vlaneseq
        %v330 = vand.u32 %v329, 127
        %v331 = vadd.s32 %v330, 128
        %v332 = vstv %s328
        %v333 = vadd.s32 %v332, %v330
        %v334 = vadd.s32 %v332, %v331
        %vm335 = vcmp.lt.s32.totalorder %v333, 256
        %vm336 = vcmp.lt.s32.totalorder %v334, 256
        %v337 = vld [vmem:[%s232] sm:$0x3]
        %v338 = vsel %vm335, %v325, 0.0
        %v339 = vsel %vm336, %v326, 0.0
        %v342 = vcombine.low %v338, %v339
        %v344 = vunpack.c.l.s4 1966171168
        %v345 = vunpack.c.0.s8 %v344
        %v346 = vlaneseq
        %v347 = vshrl.u32 %v346, 7
        %v348 = vsub.s32 %v345, %v347
        %v349 = vrot.slane %v342, %v348
        %v351 = vunpack.c.l.s4 1966171168
        %v352 = vunpack.c.0.s8 %v351
        %v353 = vlaneseq
        %v354 = vshrl.u32 %v353, 7
        %v355 = vsub.s32 %v352, %v354
        %v356 = vrot.slane %v349, %v355
        %v358 = vadd.f32 %v337, %v356
        %v359 = vlaneseq
        %vm360 = vcmp.ge.s32.totalorder %v359, 0
        %vm361 = vcmp.lt.s32.totalorder %v359, 256
        %vm362 = vmand %vm360, %vm361
        %363 = vst.msk [vmem:[%s232] sm:$0x3] %vm362, %v358
        %s364 = sand.u32 %s111, 1
        %s365 = scalar_lea.sflag [#allocation4], %s364
        %s366 = sand.u32 %s111, 1
        %s367 = smul.addr %s366, 2
        %s368 = scalar_lea.vmem [#allocation7], %s367
        // Predicated region
        $region41: #{tpu_custom_call.1} parent=27 // pred_check
          %p369 = pneg %p121
        $region42: #{tpu_custom_call.1} parent=27 // pred_check_branch
          %371 = sbr.rel (%p369) target = $region44
        $region43: #{tpu_custom_call.1} parent=27 // pred_region
          %s373 = ssub.s32 32, 32
          %374 = vsyncadd %s365, %s373
          %s375 = smul.addr %s28, 2
          %s376 = smul.addr %s27, 2
          %s377 = sadd.s32 %s375, %s376
          %s378 = smul.addr %s377, 16
          %s379 = scalar_lea.hbm %s2, %s378
          %s381 = sshll.u32 %s368, 4
          %s382 = int_to_ptr.vmem [resolvable:$true] %s381
          %384 = dma.vmem_to_hbm [thread:$0]  %s382, 32, %s379, %s365
        $region44: #{tpu_custom_call.1} parent=27 // pred_fallthru
          _
      $region28: #{tpu_custom_call.1} parent=5 // pred_fallthru
        _
      %p385 = scmp.le.s32.totalorder 2, %s17
      // Predicated region
      $region45: #{tpu_custom_call.1} parent=5 // pred_check
        %p386 = pneg %p385
      $region46: #{tpu_custom_call.1} parent=5 // pred_check_branch
        %388 = sbr.rel (%p386) target = $region48
      $region47: #{tpu_custom_call.1} parent=5 // pred_region
        %s389 = ssub.s32 %s17, 2
        // Predicated region
        $region49: #{tpu_custom_call.1} parent=47 // pred_check
          %p390 = pneg %p127
        $region50: #{tpu_custom_call.1} parent=47 // pred_check_branch
          %392 = sbr.rel (%p390) target = $region52
        $region51: #{tpu_custom_call.1} parent=47 // pred_region
          %s393 = sand.u32 %s112, 1
          %s394 = scalar_lea.sflag [#allocation4], %s393
          %s395 = sand.u32 %s112, 1
          %s396 = smul.addr %s395, 2
          %s397 = scalar_lea.vmem [#allocation7], %s396
          %398 = dma.done %s394, 32
        $region52: #{tpu_custom_call.1} parent=47 // pred_fallthru
          _
      $region48: #{tpu_custom_call.1} parent=5 // pred_fallthru
        _
    $region6: #{tpu_custom_call.1} parent=1 // loop_footer
      %s21 = sadd.s32 1, %s17
    $region7: #{tpu_custom_call.1} parent=1 // loop_footer_branch
      %16 = sbr.rel target = $region3
    $region8: #{tpu_custom_call.1} parent=1 // loop_exit
      _
    %399 = vsyncpa [#allocation3], 1
    %s400 = scalar_lea.sflag [#allocation3], 1
    %401 = vsyncpa %s400, 1
    %402 = vsyncpa [#allocation6], 1
    %s403 = scalar_lea.sflag [#allocation6], 1
    %404 = vsyncpa %s403, 1
    %405 = vsyncpa [#allocation4], 1
    %s406 = scalar_lea.sflag [#allocation4], 1
    %407 = vsyncpa %s406, 1

</llo_original>
